<compile_context>
chip_gen: v7x
topology: tpu7x:2x2x1
jax: 0.10.0
libtpu: 0.0.40
codegen_flags: <defaults>
</compile_context>

<pallas_src>
import functools
import math

import jax
import jax.numpy as jnp
from jax.experimental import pallas as pl
from jax.experimental.pallas import tpu as pltpu


# ---------------------------------------------------------------- tiling utils

def _pick_tile(n, candidates):
    for c in candidates:
        if c <= n and n % c == 0:
            return c
    return n


# ---------------------------------------------- fused linear (+ bias, + relu)

def _linear_kernel(x_ref, w_ref, b_ref, o_ref, *, relu: bool):
    acc = jnp.dot(x_ref[...], w_ref[...], preferred_element_type=jnp.float32)
    acc = acc + b_ref[...]
    if relu:
        acc = jnp.maximum(acc, 0.0)
    o_ref[...] = acc.astype(o_ref.dtype)


def linear(x, w, b, *, relu=False):
    """x: (M, K), w: (K, Cout), b: (Cout,) -> act(x @ w + b), shape (M, Cout)."""
    M, K = x.shape
    K2, Cout = w.shape
    assert K == K2
    tm = _pick_tile(M, (256, 128, 64, 32, 16, 8))
    grid = (M // tm,)
    b2 = b.reshape(1, Cout)
    kernel = functools.partial(_linear_kernel, relu=relu)
    return pl.pallas_call(
        kernel,
        out_shape=jax.ShapeDtypeStruct((M, Cout), x.dtype),
        grid=grid,
        in_specs=[
            pl.BlockSpec((tm, K), lambda i: (i, 0)),
            pl.BlockSpec((K, Cout), lambda i: (0, 0)),   # weights stay resident
            pl.BlockSpec((1, Cout), lambda i: (0, 0)),
        ],
        out_specs=pl.BlockSpec((tm, Cout), lambda i: (i, 0)),
        compiler_params=pltpu.CompilerParams(
            dimension_semantics=("parallel",)),
        cost_estimate=pl.CostEstimate(
            flops=2 * M * K * Cout,
            transcendentals=0,
            bytes_accessed=4 * (M * K + K * Cout + M * Cout + Cout)),
    )(x, w, b2)


# ------------------------------------------- batched (B,N,3) @ (B,3,3) kernel

def _bmm_kernel(a_ref, t_ref, o_ref):
    o_ref[0] = jnp.dot(a_ref[0], t_ref[0],
                       preferred_element_type=jnp.float32).astype(o_ref.dtype)


def batched_point_transform(pts, trans):
    """pts: (B, N, 3), trans: (B, 3, 3) -> (B, N, 3)."""
    B, N, K = pts.shape
    return pl.pallas_call(
        _bmm_kernel,
        out_shape=jax.ShapeDtypeStruct((B, N, K), pts.dtype),
        grid=(B,),
        in_specs=[
            pl.BlockSpec((1, N, K), lambda b: (b, 0, 0)),
            pl.BlockSpec((1, K, K), lambda b: (b, 0, 0)),
        ],
        out_specs=pl.BlockSpec((1, N, K), lambda b: (b, 0, 0)),
        compiler_params=pltpu.CompilerParams(
            dimension_semantics=("parallel",)),
    )(pts, trans)


# ------------------------------------ max pool over the point axis (tiled N)

def _maxpool_kernel(x_ref, o_ref, acc_ref):
    k = pl.program_id(1)

    @pl.when(k == 0)
    def _():
        acc_ref[...] = jnp.full_like(acc_ref, -jnp.inf)

    # x block: (TB, TN, C) with C on lanes -> sublane/VPU reduce over TN.
    acc_ref[...] = jnp.maximum(acc_ref[...], jnp.max(x_ref[...], axis=1))

    @pl.when(k == pl.num_programs(1) - 1)
    def _():
        o_ref[...] = acc_ref[...].astype(o_ref.dtype)


def max_pool_points(x):
    """x: (B, N, C) -> (B, C), max over the point axis N."""
    B, N, C = x.shape
    tb = _pick_tile(B, (8, 4, 2, 1))
    tn = _pick_tile(N, (512, 256, 128, 8))    # bounded tile regardless of N
    grid = (B // tb, N // tn)
    return pl.pallas_call(
        _maxpool_kernel,
        out_shape=jax.ShapeDtypeStruct((B, C), x.dtype),
        grid=grid,
        in_specs=[pl.BlockSpec((tb, tn, C), lambda b, k: (b, k, 0))],
        out_specs=pl.BlockSpec((tb, C), lambda b, k: (b, 0)),
        scratch_shapes=[pltpu.VMEM((tb, C), jnp.float32)],
        compiler_params=pltpu.CompilerParams(
            dimension_semantics=("parallel", "arbitrary")),
    )(x)


# ------------------------------------------------------------ model forwards

def stn3d_forward(pts, p):
    """STN3d(k=3, use_bn=False): pts (B, N, 3) -> trans (B, 3, 3)."""
    B, N, _ = pts.shape
    h = pts.reshape(B * N, 3)
    h = linear(h, p["stn_conv1_w"], p["stn_conv1_b"], relu=True)    # (BN, 64)
    h = linear(h, p["stn_conv2_w"], p["stn_conv2_b"], relu=True)    # (BN, 128)
    h = linear(h, p["stn_conv3_w"], p["stn_conv3_b"], relu=True)    # (BN, 1024)
    g = max_pool_points(h.reshape(B, N, 1024))                      # (B, 1024)
    g = linear(g, p["stn_fc1_w"], p["stn_fc1_b"], relu=True)        # (B, 512)
    g = linear(g, p["stn_fc2_w"], p["stn_fc2_b"], relu=True)        # (B, 256)
    # fc3 (zero-init) + identity: fold the identity into the bias.
    iden = jnp.eye(3, dtype=pts.dtype).reshape(9)
    t = linear(g, p["stn_fc3_w"], p["stn_fc3_b"] + iden, relu=False)  # (B, 9)
    return t.reshape(B, 3, 3)


def pointnetfeat_forward(x, p):
    """x: (B, 1, N, 3) -> (global feature (B, 64), trans (B, 3, 3))."""
    B = x.shape[0]
    pts = jnp.squeeze(x, axis=1)                      # torch.squeeze (B>1)
    trans = stn3d_forward(pts, p)                     # (B, 3, 3)
    pts_t = batched_point_transform(pts, trans)       # (B, N, 3)
    N = pts_t.shape[1]
    h = pts_t.reshape(B * N, 3)
    h = linear(h, p["conv1_w"], p["conv1_b"], relu=True)   # conv1 + bn1 folded
    h = linear(h, p["conv2_w"], p["conv2_b"], relu=True)   # conv2 + bn2 folded
    g = max_pool_points(h.reshape(B, N, 64))                # (B, 64)
    return g, trans


# ---------------------------------------------------------------- reference

def pointnetfeat_reference(x, p):
    pts = jnp.squeeze(x, axis=1)
    B, N, _ = pts.shape

    def lin(h, w, b, relu):
        y = h @ w + b
        return jnp.maximum(y, 0.0) if relu else y

    h = pts.reshape(B * N, 3)
    h = lin(h, p["stn_conv1_w"], p["stn_conv1_b"], True)
    h = lin(h, p["stn_conv2_w"], p["stn_conv2_b"], True)
    h = lin(h, p["stn_conv3_w"], p["stn_conv3_b"], True)
    g = jnp.max(h.reshape(B, N, -1), axis=1)
    g = lin(g, p["stn_fc1_w"], p["stn_fc1_b"], True)
    g = lin(g, p["stn_fc2_w"], p["stn_fc2_b"], True)
    iden = jnp.eye(3, dtype=x.dtype).reshape(9)
    trans = lin(g, p["stn_fc3_w"], p["stn_fc3_b"] + iden, False).reshape(B, 3, 3)

    pts_t = jnp.einsum("bnk,bkj->bnj", pts, trans)
    h = pts_t.reshape(B * N, 3)
    h = lin(h, p["conv1_w"], p["conv1_b"], True)
    h = lin(h, p["conv2_w"], p["conv2_b"], True)
    g = jnp.max(h.reshape(B, N, -1), axis=1)
    return g, trans


# ------------------------------------------------------------------- params

def init_params(key, dtype=jnp.float32):
    def uniform_init(k, shape, fan_in):
        bound = 1.0 / math.sqrt(fan_in)
        return jax.random.uniform(k, shape, dtype, minval=-bound, maxval=bound)

    def linear_params(k, cin, cout):
        kw, kb = jax.random.split(k)
        return uniform_init(kw, (cin, cout), cin), uniform_init(kb, (cout,), cin)

    def fold_bn(w, b, cout, eps=1e-5):
        # Fresh BatchNorm2d: gamma=1, beta=0, running_mean=0, running_var=1.
        gamma = jnp.ones((cout,), dtype)
        beta = jnp.zeros((cout,), dtype)
        mean = jnp.zeros((cout,), dtype)
        var = jnp.ones((cout,), dtype)
        scale = gamma / jnp.sqrt(var + eps)
        return w * scale[None, :], (b - mean) * scale + beta

    keys = jax.random.split(key, 8)
    p = {}
    p["stn_conv1_w"], p["stn_conv1_b"] = linear_params(keys[0], 3, 64)
    p["stn_conv2_w"], p["stn_conv2_b"] = linear_params(keys[1], 64, 128)
    p["stn_conv3_w"], p["stn_conv3_b"] = linear_params(keys[2], 128, 1024)
    p["stn_fc1_w"], p["stn_fc1_b"] = linear_params(keys[3], 1024, 512)
    p["stn_fc2_w"], p["stn_fc2_b"] = linear_params(keys[4], 512, 256)
    p["stn_fc3_w"] = jnp.zeros((256, 9), dtype)   # fc3.weight.data.zero_()
    p["stn_fc3_b"] = jnp.zeros((9,), dtype)       # fc3.bias.data.zero_()

    conv1_w, conv1_b = linear_params(keys[5], 3, 64)
    conv2_w, conv2_b = linear_params(keys[6], 64, 64)
    p["conv1_w"], p["conv1_b"] = fold_bn(conv1_w, conv1_b, 64)
    p["conv2_w"], p["conv2_b"] = fold_bn(conv2_w, conv2_b, 64)
    return p


if __name__ == "__main__":
    key = jax.random.PRNGKey(0)
    kx, kp = jax.random.split(key)

    B, N = 2, 16                          # small: batch=2, num_points=16
    x = jax.random.normal(kx, (B, 1, N, 3), dtype=jnp.float32)
    params = init_params(kp)

    feat, trans = pointnetfeat_forward(x, params)
    feat = jax.block_until_ready(feat)
    trans = jax.block_until_ready(trans)

    ref_feat, ref_trans = pointnetfeat_reference(x, params)
    assert feat.shape == (B, 64), feat.shape
    assert trans.shape == (B, 3, 3), trans.shape
    assert jnp.allclose(trans, ref_trans, rtol=1e-2, atol=1e-2), (trans, ref_trans)
    assert jnp.allclose(feat, ref_feat, rtol=1e-2, atol=1e-2), (feat, ref_feat)

    print("KERNEL_OK")
</pallas_src>

<mosaic_0001>
module attributes {stable_mosaic.version = 11 : i64} {
  func.func @_linear_kernel(%arg0: i32, %arg1: memref<32x3xf32, #tpu.memory_space<vmem>>, %arg2: memref<3x64xf32, #tpu.memory_space<vmem>>, %arg3: memref<1x64xf32, #tpu.memory_space<vmem>>, %arg4: memref<32x64xf32, #tpu.memory_space<vmem>>) attributes {dimension_semantics = [#tpu.dimension_semantics<parallel>], iteration_bounds = array<i64: 1>, scalar_prefetch = 0 : i64, scratch_operands = 0 : i64, tpu.core_type = #tpu.core_type<tc>, window_params = [{transform_indices = @transform_0, window_bounds = array<i64: 32, 3>}, {pipeline_mode = #tpu.pipeline_mode<synchronous>, transform_indices = @transform_1, window_bounds = array<i64: 3, 64>}, {pipeline_mode = #tpu.pipeline_mode<synchronous>, transform_indices = @transform_2, window_bounds = array<i64: 1, 64>}, {transform_indices = @transform_3, window_bounds = array<i64: 32, 64>}]} {
    %c0 = arith.constant 0 : index
    %c0_0 = arith.constant 0 : index
    %0 = vector.load %arg1[%c0, %c0_0] : memref<32x3xf32, #tpu.memory_space<vmem>>, vector<32x3xf32>
    %c0_1 = arith.constant 0 : index
    %c0_2 = arith.constant 0 : index
    %1 = vector.load %arg2[%c0_1, %c0_2] : memref<3x64xf32, #tpu.memory_space<vmem>>, vector<3x64xf32>
    %cst = arith.constant dense<0.000000e+00> : vector<32x64xf32>
    %2 = tpu.matmul %0, %1, %cst {dimension_numbers = #tpu.dot_dimension_numbers<[1], [0], [0], [1], [0, 0, 1, 1], [], []>} : vector<32x3xf32>, vector<3x64xf32>, vector<32x64xf32> -> vector<32x64xf32>
    %c0_3 = arith.constant 0 : index
    %c0_4 = arith.constant 0 : index
    %3 = vector.load %arg3[%c0_3, %c0_4] : memref<1x64xf32, #tpu.memory_space<vmem>>, vector<1x64xf32>
    %4 = vector.broadcast %3 : vector<1x64xf32> to vector<32x64xf32>
    %5 = arith.addf %2, %4 : vector<32x64xf32>
    %cst_5 = arith.constant 0.000000e+00 : f32
    %6 = vector.broadcast %cst_5 : f32 to vector<32x64xf32>
    %7 = arith.maximumf %5, %6 : vector<32x64xf32>
    %c0_6 = arith.constant 0 : index
    %c0_7 = arith.constant 0 : index
    %8 = vector.load %arg4[%c0_6, %c0_7] : memref<32x64xf32, #tpu.memory_space<vmem>>, vector<32x64xf32>
    tpu.vector_store %arg4[%c0_6, %c0_7], %7 {strides = array<i32>} : memref<32x64xf32, #tpu.memory_space<vmem>>, vector<32x64xf32>,
    return
  }
  func.func @transform_0(%arg0: i32) -> (i32, i32) {
    %c0_i32 = arith.constant 0 : i32
    %c0_i32_0 = arith.constant 0 : i32
    return %arg0, %c0_i32 : i32, i32
  }
  func.func @transform_1(%arg0: i32) -> (i32, i32) {
    %c0_i32 = arith.constant 0 : i32
    %c0_i32_0 = arith.constant 0 : i32
    %c0_i32_1 = arith.constant 0 : i32
    return %c0_i32, %c0_i32_0 : i32, i32
  }
  func.func @transform_2(%arg0: i32) -> (i32, i32) {
    %c0_i32 = arith.constant 0 : i32
    %c0_i32_0 = arith.constant 0 : i32
    %c0_i32_1 = arith.constant 0 : i32
    return %c0_i32, %c0_i32_0 : i32, i32
  }
  func.func @transform_3(%arg0: i32) -> (i32, i32) {
    %c0_i32 = arith.constant 0 : i32
    %c0_i32_0 = arith.constant 0 : i32
    return %arg0, %c0_i32 : i32, i32
  }
}

</mosaic_0001>

<llo_original>
// kernel: tpu_custom_call.1
$region0: #{tpu_custom_call.1}
  #allocation0 [shape = 'u32[]', space=smem, size = 0x4, offset = 0x4, fixed_abs, tag = 'smem constant byte address 0x4 - core index']
  #allocation1 [shape = 'u32[144,128]{1,0:T(1,128)}', space=vmem, size = 0x12000, scoped, tag = 'internal scratch']
  %s0 = inlined_call_operand.vmem [shape: f32[32,3], index: 0, kind: input, shape index: {}]
  %s1 = inlined_call_operand.vmem [shape: f32[3,64], index: 1, kind: input, shape index: {}]
  %s2 = inlined_call_operand.vmem [shape: f32[1,64], index: 2, kind: input, shape index: {}]
  %s3 = inlined_call_operand.hbm [shape: f32[32,64], index: 3, kind: output, shape index: {}]
  %s4 = sld [smem:[#allocation0]]
  $region22: #{tpu_custom_call.1} parent=0
    _
  %s6 = ssub.s32 1, %s4
  %s7 = scalar_select 0, %s6, %s4
  $region1: #{tpu_custom_call.1} parent=0
    #allocation2 [shape = 'u8[16384]{0}', space=vmem, size = 0x4000, scoped, tag = 'output window, operand 0, single buffered']
    #allocation3 [shape = 's32[1]{0}', space=sflag, size = 0x4, scoped, tag = 'scoped memory for tpu_custom_call.1']
    %8 = vsyncpa [#allocation3], 0
    // Predicated region
    $region2: #{tpu_custom_call.1} parent=1 // pred_check
      _
    $region3: #{tpu_custom_call.1} parent=1 // pred_check_branch
      %10 = sbr.rel (0) target = $region5
    $region4: #{tpu_custom_call.1} parent=1 // pred_region
      _
    $region5: #{tpu_custom_call.1} parent=1 // pred_fallthru
      _
    // Predicated region
    $region6: #{tpu_custom_call.1} parent=1 // pred_check
      _
    $region7: #{tpu_custom_call.1} parent=1 // pred_check_branch
      %12 = sbr.rel (0) target = $region9
    $region8: #{tpu_custom_call.1} parent=1 // pred_region
      _
    $region9: #{tpu_custom_call.1} parent=1 // pred_fallthru
      _
    // Predicated region
    $region10: #{tpu_custom_call.1} parent=1 // pred_check
      _
    $region11: #{tpu_custom_call.1} parent=1 // pred_check_branch
      %14 = sbr.rel (0) target = $region13
    $region12: #{tpu_custom_call.1} parent=1 // pred_region
      _
    $region13: #{tpu_custom_call.1} parent=1 // pred_fallthru
      _
    %v15 = vld [vmem:[%s0] sm:$0xff]
    %v16 = vld [vmem:[%s0 + $0x8] sm:$0xff]
    %v17 = vld [vmem:[%s0 + $0x10] sm:$0xff]
    %v18 = vld [vmem:[%s0 + $0x18] sm:$0xff]
    %v19 = vld [vmem:[%s1] sm:$0x7]
    %v20 = vld [vmem:[%s2] sm:$0x1]
    %v22 = vlaneseq
    %v23 = vshrl.u32 %v22, 7
    %v24 = vsub.s32 0, %v23
    %v25 = vrot.slane %v20, %v24
    %vm27 = vcmask 23552
    %v29 = vsel %vm27, %v15, 0
    %v32 = vsel %vm27, %v16, 0
    %v35 = vsel %vm27, %v17, 0
    %v38 = vsel %vm27, %v18, 0
    %vm40 = vcmask 1042432
    %v42 = vsel %vm40, %v19, 0
    %44 = vmatprep.subr.mxu0 0.0
    %45 = vmatpush1.msra.mxu0 %v42
    %46 = vmatprep.subr.mxu0 0.0
    %47 = vmatpush1.msra.mxu0 0.0
    %48 = vmatprep.subr.mxu0 0.0
    %49 = vmatpush1.msra.mxu0 0.0
    %50 = vmatprep.subr.mxu0 0.0
    %51 = vmatpush1.msra.mxu0 0.0
    %52 = vmatprep.subr.mxu0 0.0
    %53 = vmatpush1.msra.mxu0 0.0
    %54 = vmatprep.subr.mxu0 0.0
    %55 = vmatpush1.msra.mxu0 0.0
    %56 = vmatprep.subr.mxu0 0.0
    %57 = vmatpush1.msra.mxu0 0.0
    %58 = vmatprep.subr.mxu0 0.0
    %59 = vmatpush1.msra.mxu0 0.0
    %60 = vmatprep.subr.mxu0 0.0
    %61 = vmatpush1.msra.mxu0 0.0
    %62 = vmatprep.subr.mxu0 0.0
    %63 = vmatpush1.msra.mxu0 0.0
    %64 = vmatprep.subr.mxu0 0.0
    %65 = vmatpush1.msra.mxu0 0.0
    %66 = vmatprep.subr.mxu0 0.0
    %67 = vmatpush1.msra.mxu0 0.0
    %68 = vmatprep.subr.mxu0 0.0
    %69 = vmatpush1.msra.mxu0 0.0
    %70 = vmatprep.subr.mxu0 0.0
    %71 = vmatpush1.msra.mxu0 0.0
    %72 = vmatprep.subr.mxu0 0.0
    %73 = vmatpush1.msra.mxu0 0.0
    %74 = vmatprep.subr.mxu0 0.0
    %75 = vmatpush1.msra.mxu0 0.0
    %76 = vmatprep.subr.mxu0 0.0
    %77 = vmatpush1.msra.mxu0 0.0
    %78 = vmatprep.subr.mxu0 0.0
    %79 = vmatpush1.msra.mxu0 0.0
    %80 = vmatprep.subr.mxu0 0.0
    %81 = vmatpush1.msra.mxu0 0.0
    %82 = vmatprep.subr.mxu0 0.0
    %83 = vmatpush1.msra.mxu0 0.0
    %84 = vmatprep.subr.mxu0 0.0
    %85 = vmatpush1.msra.mxu0 0.0
    %86 = vmatprep.subr.mxu0 0.0
    %87 = vmatpush1.msra.mxu0 0.0
    %88 = vmatprep.subr.mxu0 0.0
    %89 = vmatpush1.msra.mxu0 0.0
    %90 = vmatprep.subr.mxu0 0.0
    %91 = vmatpush1.msra.mxu0 0.0
    %92 = vmatprep.subr.mxu0 0.0
    %93 = vmatpush1.msra.mxu0 0.0
    %94 = vmatprep.subr.mxu0 0.0
    %95 = vmatpush1.msra.mxu0 0.0
    %96 = vmatprep.subr.mxu0 0.0
    %97 = vmatpush1.msra.mxu0 0.0
    %98 = vmatprep.subr.mxu0 0.0
    %99 = vmatpush1.msra.mxu0 0.0
    %100 = vmatprep.subr.mxu0 0.0
    %101 = vmatpush1.msra.mxu0 0.0
    %102 = vmatprep.subr.mxu0 0.0
    %103 = vmatpush1.msra.mxu0 0.0
    %104 = vmatprep.subr.mxu0 0.0
    %105 = vmatpush1.msra.mxu0 0.0
    %106 = vmatprep.subr.mxu0 0.0
    %107 = vmatpush1.msra.mxu0 0.0
    %108 = vmatprep.mubr.f32.mxu0 0.0
    %109 = vmatmul.mubr.f32.gmra.mrb[0].mxu0 %v29
    %v110 = vpop.f32.mrb[0].mxu0
    %v111 = vadd.f32 %v25, %v110
    %v112 = vpop.f32.mrb[0].mxu0
    %113 = vmatprep.mubr.f32.mxu0 0.0
    %114 = vmatmul.mubr.f32.gmra.mrb[0].mxu0 %v32
    %v115 = vpop.f32.mrb[0].mxu0
    %v116 = vadd.f32 %v25, %v115
    %v117 = vpop.f32.mrb[0].mxu0
    %118 = vmatprep.mubr.f32.mxu0 0.0
    %119 = vmatmul.mubr.f32.gmra.mrb[0].mxu0 %v35
    %v120 = vpop.f32.mrb[0].mxu0
    %v121 = vadd.f32 %v25, %v120
    %v122 = vpop.f32.mrb[0].mxu0
    %123 = vmatprep.mubr.f32.mxu0 0.0
    %124 = vmatmul.mubr.f32.gmra.mrb[0].mxu0 %v38
    %v125 = vpop.f32.mrb[0].mxu0
    %v126 = vadd.f32 %v25, %v125
    %v127 = vpop.f32.mrb[0].mxu0
    %128 = vdwg.mxu0
    %v129 = vmax.f32 %v111, 0.0
    %v130 = vmax.f32 %v116, 0.0
    %v131 = vmax.f32 %v121, 0.0
    %v132 = vmax.f32 %v126, 0.0
    %vm133 = vcmask 523264
    %134 = vst.msk [vmem:[#allocation2] sm:$0xff] %vm133, %v129
    %135 = vst.msk [vmem:[#allocation2 + $0x8] sm:$0xff] %vm133, %v130
    %136 = vst.msk [vmem:[#allocation2 + $0x10] sm:$0xff] %vm133, %v131
    %137 = vst.msk [vmem:[#allocation2 + $0x18] sm:$0xff] %vm133, %v132
    // Predicated region
    $region14: #{tpu_custom_call.1} parent=1 // pred_check
      _
    $region15: #{tpu_custom_call.1} parent=1 // pred_check_branch
      %139 = sbr.rel (0) target = $region17
    $region16: #{tpu_custom_call.1} parent=1 // pred_region
      %s141 = ssub.s32 512, 512
      %142 = vsyncadd [#allocation3], %s141
      %s143 = sshll.u32 [#allocation2], 4
      %s144 = int_to_ptr.vmem [resolvable:$true] %s143
      %149 = dma.vmem_to_hbm [thread:$0]  %s144, 512, %s3, [#allocation3], 128, 128, 8
    $region17: #{tpu_custom_call.1} parent=1 // pred_fallthru
      _
    // Predicated region
    $region18: #{tpu_custom_call.1} parent=1 // pred_check
      _
    $region19: #{tpu_custom_call.1} parent=1 // pred_check_branch
      %151 = sbr.rel (0) target = $region21
    $region20: #{tpu_custom_call.1} parent=1 // pred_region
      %152 = dma.done [#allocation3], 512
    $region21: #{tpu_custom_call.1} parent=1 // pred_fallthru
      _
    %153 = vsyncpa [#allocation3], 1

</llo_original>
